<compile_context>
chip_gen: v7x
topology: tpu7x:2x2x1
jax: 0.10.0
libtpu: 0.0.40
codegen_flags: <defaults>
</compile_context>

<pallas_src>
import math
import functools

import jax
import jax.numpy as jnp
from jax.experimental import pallas as pl
from jax.experimental.pallas import tpu as pltpu


def _round_up(x: int, m: int) -> int:
    return ((x + m - 1) // m) * m


def linear_kernel(x_ref, w_ref, b_ref, o_ref, acc_ref):
    """Tiled matmul with bias folded into the accumulator init.

    Grid = (M/tm, N/tn, K/tk); K is the reduction axis (last, 'arbitrary').
    acc_ref is a persistent f32 VMEM accumulator for the current (i, j) tile.
    """
    k = pl.program_id(2)

    @pl.when(k == 0)
    def _init():
        # Fold the bias in here instead of adding it in the finalize path.
        acc_ref[...] = jnp.broadcast_to(
            b_ref[...].astype(jnp.float32), acc_ref.shape
        )

    acc_ref[...] += jnp.dot(
        x_ref[...], w_ref[...], preferred_element_type=jnp.float32
    )

    @pl.when(k == pl.num_programs(2) - 1)
    def _finalize():
        o_ref[...] = acc_ref[...].astype(o_ref.dtype)


def _pick_tiles(M: int, K: int, N: int, compute_dtype) -> tuple[int, int, int]:
    """Default tiles: 256/512-granular, falling back to the (padded) full extent
    when the dimension is smaller.  Sublane granularity of the x/out tiles depends
    on the compute dtype packing (f32 -> 8, bf16 -> 16)."""
    itemsize = jnp.dtype(compute_dtype).itemsize
    m_gran = 8 * max(1, 4 // itemsize)          # 8 for f32, 16 for bf16
    tm = min(256, _round_up(M, m_gran))
    tk = min(512, _round_up(K, 128))
    tn = min(512, _round_up(N, 128))
    return tm, tn, tk


@functools.partial(jax.jit, static_argnames=("tm", "tn", "tk", "compute_dtype"))
def linear_layer(x, w, b, *, tm=None, tn=None, tk=None, compute_dtype=None):
    """y = x @ w + b with a Pallas TPU kernel.

    compute_dtype: optional MXU operand dtype (e.g. jnp.bfloat16 on v6e/v7x);
    accumulation and the bias add always happen in f32, output keeps x.dtype.
    """
    M, K = x.shape
    K2, N = w.shape
    assert K == K2, "in_features mismatch"
    out_dtype = x.dtype
    cdt = jnp.dtype(compute_dtype) if compute_dtype is not None else jnp.dtype(x.dtype)

    tm0, tn0, tk0 = _pick_tiles(M, K, N, cdt)
    tm = tm or tm0
    tn = tn or tn0
    tk = tk or tk0

    # Pad every dimension up to a tile multiple (handles arbitrary shapes and
    # guarantees lane-dense (>=128) output stores).  Zero padding along K is
    # exact: padded x columns hit padded (zero) W rows.
    Mp, Kp, Np = _round_up(M, tm), _round_up(K, tk), _round_up(N, tn)

    xp = x.astype(cdt)
    wp = w.astype(cdt)
    bp = b.reshape(1, N).astype(jnp.float32)   # bias stays f32 for the f32 accumulator
    if (Mp, Kp) != (M, K):
        xp = jnp.pad(xp, ((0, Mp - M), (0, Kp - K)))
    if (Kp, Np) != (K, N):
        wp = jnp.pad(wp, ((0, Kp - K), (0, Np - N)))
    if Np != N:
        bp = jnp.pad(bp, ((0, 0), (0, Np - N)))

    grid = (Mp // tm, Np // tn, Kp // tk)

    # Explicit scoped-VMEM budget: double-buffered x/W/bias tiles + f32 acc +
    # double-buffered output tile, with margin; cap at 48 MiB (safe on v7x).
    in_bytes = jnp.dtype(cdt).itemsize
    out_bytes = jnp.dtype(out_dtype).itemsize
    need = (2 * (tm * tk + tk * tn) * in_bytes
            + 2 * tn * 4
            + tm * tn * 4
            + 2 * tm * tn * out_bytes)
    vmem_limit = min(max(2 * need, 32 * 1024 * 1024), 48 * 1024 * 1024)

    # NOTE: for very small M (weight-bandwidth-bound), pl.Buffered(3) on the W
    # BlockSpec can deepen prefetch further; default 2-deep buffering is used here.
    out_padded = pl.pallas_call(
        linear_kernel,
        out_shape=jax.ShapeDtypeStruct((Mp, Np), out_dtype),
        grid_spec=pltpu.PrefetchScalarGridSpec(
            num_scalar_prefetch=0,
            grid=grid,
            in_specs=[
                pl.BlockSpec((tm, tk), lambda i, j, k: (i, k)),   # x tile
                pl.BlockSpec((tk, tn), lambda i, j, k: (k, j)),   # W tile
                pl.BlockSpec((1, tn), lambda i, j, k: (0, j)),    # bias tile (f32)
            ],
            out_specs=pl.BlockSpec((tm, tn), lambda i, j, k: (i, j)),
            scratch_shapes=[pltpu.VMEM((tm, tn), jnp.float32)],
        ),
        compiler_params=pltpu.CompilerParams(
            dimension_semantics=("parallel", "parallel", "arbitrary"),
            vmem_limit_bytes=vmem_limit,
        ),
    )(xp, wp, bp)

    if (Mp, Np) != (M, N):
        out_padded = out_padded[:M, :N]
    return out_padded


def init_linear_params(key, in_features, out_features):
    """Deterministic init matching THIS module's reset_parameters().

    The module stores weight as (in_features, out_features); PyTorch's
    _calculate_fan_in_and_fan_out uses fan_in = weight.shape[1] = out_features
    for this layout (it is NOT a stock nn.Linear, which stores [out, in]).
    kaiming_uniform_(a=sqrt(5)) -> bound = 1/sqrt(fan_in); bias ~ U(+-1/sqrt(fan_in)).
    """
    kw, kb = jax.random.split(key)
    fan_in = out_features
    gain = math.sqrt(2.0 / (1.0 + 5.0))               # leaky_relu gain, a = sqrt(5)
    bound_w = gain * math.sqrt(3.0 / fan_in)          # == 1/sqrt(fan_in)
    weight = jax.random.uniform(
        kw, (in_features, out_features), jnp.float32, -bound_w, bound_w
    )
    bound_b = 1.0 / math.sqrt(fan_in)
    bias = jax.random.uniform(kb, (out_features,), jnp.float32, -bound_b, bound_b)
    return weight, bias


if __name__ == "__main__":
    key = jax.random.PRNGKey(0)
    k_x, k_p, k_x2, k_p2 = jax.random.split(key, 4)

    # Case 1: tiny shapes, pure f32 path (exact module semantics, tight tolerance).
    batch, in_features, out_features = 8, 32, 64
    x = jax.random.normal(k_x, (batch, in_features), dtype=jnp.float32)
    weight, bias = init_linear_params(k_p, in_features, out_features)

    y = linear_layer(x, weight, bias)
    jax.block_until_ready(y)

    y_ref = x @ weight + bias
    assert y.shape == (batch, out_features)
    assert jnp.allclose(y, y_ref, atol=1e-5, rtol=1e-5)

    # Case 2: exercises multi-tile grid (K and N tiling), padding (N=640 -> 1024),
    # and the bf16-operand / f32-accumulate fast path for v6e/v7x MXUs.
    M2, K2, N2 = 256, 1024, 640
    x2 = jax.random.normal(k_x2, (M2, K2), dtype=jnp.float32)
    w2, b2 = init_linear_params(k_p2, K2, N2)

    y2 = linear_layer(x2, w2, b2, compute_dtype=jnp.bfloat16)
    jax.block_until_ready(y2)

    x2b = x2.astype(jnp.bfloat16).astype(jnp.float32)
    w2b = w2.astype(jnp.bfloat16).astype(jnp.float32)
    y2_ref = x2b @ w2b + b2
    assert y2.shape == (M2, N2)
    assert jnp.allclose(y2, y2_ref, atol=2e-2, rtol=2e-2)

    print("KERNEL_OK")
</pallas_src>

<mosaic_0001>
module attributes {stable_mosaic.version = 11 : i64} {
  func.func @linear_kernel(%arg0: i32, %arg1: i32, %arg2: i32, %arg3: memref<8x128xf32, #tpu.memory_space<vmem>>, %arg4: memref<128x128xf32, #tpu.memory_space<vmem>>, %arg5: memref<1x128xf32, #tpu.memory_space<vmem>>, %arg6: memref<8x128xf32, #tpu.memory_space<vmem>>, %arg7: memref<8x128xf32, #tpu.memory_space<vmem>>) attributes {dimension_semantics = [#tpu.dimension_semantics<parallel>, #tpu.dimension_semantics<parallel>, #tpu.dimension_semantics<arbitrary>], iteration_bounds = array<i64: 1, 1, 1>, scalar_prefetch = 0 : i64, scratch_operands = 1 : i64, tpu.core_type = #tpu.core_type<tc>, window_params = [{transform_indices = @transform_0, window_bounds = array<i64: 8, 128>}, {transform_indices = @transform_1, window_bounds = array<i64: 128, 128>}, {transform_indices = @transform_2, window_bounds = array<i64: 1, 128>}, {transform_indices = @transform_3, window_bounds = array<i64: 8, 128>}]} {
    %c0_i32 = arith.constant 0 : i32
    %0 = arith.cmpi eq, %arg2, %c0_i32 : i32
    %1 = arith.extui %0 : i1 to i32
    %c0_i32_0 = arith.constant 0 : i32
    %2 = arith.cmpi ne, %1, %c0_i32_0 : i32
    scf.if %2 {
      %c0_10 = arith.constant 0 : index
      %c0_11 = arith.constant 0 : index
      %12 = vector.load %arg5[%c0_10, %c0_11] : memref<1x128xf32, #tpu.memory_space<vmem>>, vector<1x128xf32>
      %13 = vector.shape_cast %12 : vector<1x128xf32> to vector<1x128xf32>
      %14 = vector.broadcast %13 : vector<1x128xf32> to vector<8x128xf32>
      %c0_12 = arith.constant 0 : index
      %c0_13 = arith.constant 0 : index
      %15 = vector.load %arg7[%c0_12, %c0_13] : memref<8x128xf32, #tpu.memory_space<vmem>>, vector<8x128xf32>
      tpu.vector_store %arg7[%c0_12, %c0_13], %14 {strides = array<i32>} : memref<8x128xf32, #tpu.memory_space<vmem>>, vector<8x128xf32>,
    } else {
    }
    %c0 = arith.constant 0 : index
    %c0_1 = arith.constant 0 : index
    %3 = vector.load %arg7[%c0, %c0_1] : memref<8x128xf32, #tpu.memory_space<vmem>>, vector<8x128xf32>
    %c0_2 = arith.constant 0 : index
    %c0_3 = arith.constant 0 : index
    %4 = vector.load %arg3[%c0_2, %c0_3] : memref<8x128xf32, #tpu.memory_space<vmem>>, vector<8x128xf32>
    %c0_4 = arith.constant 0 : index
    %c0_5 = arith.constant 0 : index
    %5 = vector.load %arg4[%c0_4, %c0_5] : memref<128x128xf32, #tpu.memory_space<vmem>>, vector<128x128xf32>
    %cst = arith.constant dense<0.000000e+00> : vector<8x128xf32>
    %6 = tpu.matmul %4, %5, %cst {dimension_numbers = #tpu.dot_dimension_numbers<[1], [0], [0], [1], [0, 0, 1, 1], [], []>} : vector<8x128xf32>, vector<128x128xf32>, vector<8x128xf32> -> vector<8x128xf32>
    %7 = arith.addf %3, %6 : vector<8x128xf32>
    %c0_6 = arith.constant 0 : index
    %c0_7 = arith.constant 0 : index
    %8 = vector.load %arg7[%c0_6, %c0_7] : memref<8x128xf32, #tpu.memory_space<vmem>>, vector<8x128xf32>
    tpu.vector_store %arg7[%c0_6, %c0_7], %7 {strides = array<i32>} : memref<8x128xf32, #tpu.memory_space<vmem>>, vector<8x128xf32>,
    %c0_i32_8 = arith.constant 0 : i32
    %9 = arith.cmpi eq, %arg2, %c0_i32_8 : i32
    %10 = arith.extui %9 : i1 to i32
    %c0_i32_9 = arith.constant 0 : i32
    %11 = arith.cmpi ne, %10, %c0_i32_9 : i32
    scf.if %11 {
      %c0_10 = arith.constant 0 : index
      %c0_11 = arith.constant 0 : index
      %12 = vector.load %arg7[%c0_10, %c0_11] : memref<8x128xf32, #tpu.memory_space<vmem>>, vector<8x128xf32>
      %c0_12 = arith.constant 0 : index
      %c0_13 = arith.constant 0 : index
      %13 = vector.load %arg6[%c0_12, %c0_13] : memref<8x128xf32, #tpu.memory_space<vmem>>, vector<8x128xf32>
      tpu.vector_store %arg6[%c0_12, %c0_13], %12 {strides = array<i32>} : memref<8x128xf32, #tpu.memory_space<vmem>>, vector<8x128xf32>,
    } else {
    }
    return
  }
  func.func @transform_0(%arg0: i32, %arg1: i32, %arg2: i32) -> (i32, i32) {
    %c0_i32 = arith.constant 0 : i32
    return %arg0, %arg2 : i32, i32
  }
  func.func @transform_1(%arg0: i32, %arg1: i32, %arg2: i32) -> (i32, i32) {
    %c0_i32 = arith.constant 0 : i32
    return %arg2, %arg1 : i32, i32
  }
  func.func @transform_2(%arg0: i32, %arg1: i32, %arg2: i32) -> (i32, i32) {
    %c0_i32 = arith.constant 0 : i32
    %c0_i32_0 = arith.constant 0 : i32
    return %c0_i32, %arg1 : i32, i32
  }
  func.func @transform_3(%arg0: i32, %arg1: i32, %arg2: i32) -> (i32, i32) {
    %c0_i32 = arith.constant 0 : i32
    return %arg0, %arg1 : i32, i32
  }
}

</mosaic_0001>

<llo_original>
// kernel: linear_layer.1
$region0: #{linear_layer.1}
  #allocation0 [shape = 'u32[]', space=smem, size = 0x4, offset = 0x4, fixed_abs, tag = 'smem constant byte address 0x4 - core index']
  #allocation1 [shape = 'u32[144,128]{1,0:T(1,128)}', space=vmem, size = 0x12000, scoped, tag = 'internal scratch']
  #allocation2 [shape = 'f32[8,128]{1,0:T(8,128)}', space=vmem, size = 0x1000, scoped, tag = 'scratch operand']
  %s0 = inlined_call_operand.vmem [shape: f32[8,128], index: 0, kind: input, shape index: {}]
  %s1 = inlined_call_operand.vmem [shape: f32[128,128], index: 1, kind: input, shape index: {}]
  %s2 = inlined_call_operand.vmem [shape: f32[1,128], index: 2, kind: input, shape index: {}]
  %s3 = inlined_call_operand.hbm [shape: f32[8,128], index: 3, kind: output, shape index: {}]
  %s4 = sld [smem:[#allocation0]]
  $region30: #{linear_layer.1} parent=0
    _
  %s6 = ssub.s32 1, %s4
  %s7 = scalar_select 0, %s6, %s4
  $region1: #{linear_layer.1} parent=0
    #allocation3 [shape = 'u8[4096]{0}', space=vmem, size = 0x1000, scoped, tag = 'output window, operand 0, single buffered']
    #allocation4 [shape = 's32[1]{0}', space=sflag, size = 0x4, scoped, tag = 'scoped memory for linear_layer.1']
    %8 = vsyncpa [#allocation4], 0
    // Predicated region
    $region2: #{linear_layer.1} parent=1 // pred_check
      _
    $region3: #{linear_layer.1} parent=1 // pred_check_branch
      %10 = sbr.rel (0) target = $region5
    $region4: #{linear_layer.1} parent=1 // pred_region
      _
    $region5: #{linear_layer.1} parent=1 // pred_fallthru
      _
    // Predicated region
    $region6: #{linear_layer.1} parent=1 // pred_check
      _
    $region7: #{linear_layer.1} parent=1 // pred_check_branch
      %12 = sbr.rel (0) target = $region9
    $region8: #{linear_layer.1} parent=1 // pred_region
      _
    $region9: #{linear_layer.1} parent=1 // pred_fallthru
      _
    // Predicated region
    $region10: #{linear_layer.1} parent=1 // pred_check
      _
    $region11: #{linear_layer.1} parent=1 // pred_check_branch
      %14 = sbr.rel (0) target = $region13
    $region12: #{linear_layer.1} parent=1 // pred_region
      _
    $region13: #{linear_layer.1} parent=1 // pred_fallthru
      _
    %p15 = scmp.eq.s32.totalorder 0, 0
    // Predicated region
    $region14: #{linear_layer.1} parent=1 // pred_check
      %p16 = pneg %p15
    $region15: #{linear_layer.1} parent=1 // pred_check_branch
      %18 = sbr.rel (%p16) target = $region17
    $region16: #{linear_layer.1} parent=1 // pred_region
      %v19 = vld [vmem:[%s2] sm:$0x1]
      %v21 = vlaneseq
      %v22 = vshrl.u32 %v21, 7
      %v23 = vsub.s32 0, %v22
      %v24 = vrot.slane %v19, %v23
      %26 = vst [vmem:[#allocation2] sm:$0xff] %v24
    $region17: #{linear_layer.1} parent=1 // pred_fallthru
      _
    %v27 = vld [vmem:[#allocation2] sm:$0xff]
    %v28 = vld [vmem:[%s0] sm:$0xff]
    %v29 = vld [vmem:[%s1] sm:$0xff]
    %v30 = vld [vmem:[%s1 + $0x8] sm:$0xff]
    %v31 = vld [vmem:[%s1 + $0x10] sm:$0xff]
    %v32 = vld [vmem:[%s1 + $0x18] sm:$0xff]
    %v33 = vld [vmem:[%s1 + $0x20] sm:$0xff]
    %v34 = vld [vmem:[%s1 + $0x28] sm:$0xff]
    %v35 = vld [vmem:[%s1 + $0x30] sm:$0xff]
    %v36 = vld [vmem:[%s1 + $0x38] sm:$0xff]
    %v37 = vld [vmem:[%s1 + $0x40] sm:$0xff]
    %v38 = vld [vmem:[%s1 + $0x48] sm:$0xff]
    %v39 = vld [vmem:[%s1 + $0x50] sm:$0xff]
    %v40 = vld [vmem:[%s1 + $0x58] sm:$0xff]
    %v41 = vld [vmem:[%s1 + $0x60] sm:$0xff]
    %v42 = vld [vmem:[%s1 + $0x68] sm:$0xff]
    %v43 = vld [vmem:[%s1 + $0x70] sm:$0xff]
    %v44 = vld [vmem:[%s1 + $0x78] sm:$0xff]
    %45 = vmatprep.subr.mxu0 0.0
    %46 = vmatpush1.msra.mxu0 %v29
    %47 = vmatprep.subr.mxu0 0.0
    %48 = vmatpush1.msra.mxu0 %v30
    %49 = vmatprep.subr.mxu0 0.0
    %50 = vmatpush1.msra.mxu0 %v31
    %51 = vmatprep.subr.mxu0 0.0
    %52 = vmatpush1.msra.mxu0 %v32
    %53 = vmatprep.subr.mxu0 0.0
    %54 = vmatpush1.msra.mxu0 %v33
    %55 = vmatprep.subr.mxu0 0.0
    %56 = vmatpush1.msra.mxu0 %v34
    %57 = vmatprep.subr.mxu0 0.0
    %58 = vmatpush1.msra.mxu0 %v35
    %59 = vmatprep.subr.mxu0 0.0
    %60 = vmatpush1.msra.mxu0 %v36
    %61 = vmatprep.subr.mxu0 0.0
    %62 = vmatpush1.msra.mxu0 %v37
    %63 = vmatprep.subr.mxu0 0.0
    %64 = vmatpush1.msra.mxu0 %v38
    %65 = vmatprep.subr.mxu0 0.0
    %66 = vmatpush1.msra.mxu0 %v39
    %67 = vmatprep.subr.mxu0 0.0
    %68 = vmatpush1.msra.mxu0 %v40
    %69 = vmatprep.subr.mxu0 0.0
    %70 = vmatpush1.msra.mxu0 %v41
    %71 = vmatprep.subr.mxu0 0.0
    %72 = vmatpush1.msra.mxu0 %v42
    %73 = vmatprep.subr.mxu0 0.0
    %74 = vmatpush1.msra.mxu0 %v43
    %75 = vmatprep.subr.mxu0 0.0
    %76 = vmatpush1.msra.mxu0 %v44
    %77 = vmatprep.subr.mxu0 0.0
    %78 = vmatpush1.msra.mxu0 0.0
    %79 = vmatprep.subr.mxu0 0.0
    %80 = vmatpush1.msra.mxu0 0.0
    %81 = vmatprep.subr.mxu0 0.0
    %82 = vmatpush1.msra.mxu0 0.0
    %83 = vmatprep.subr.mxu0 0.0
    %84 = vmatpush1.msra.mxu0 0.0
    %85 = vmatprep.subr.mxu0 0.0
    %86 = vmatpush1.msra.mxu0 0.0
    %87 = vmatprep.subr.mxu0 0.0
    %88 = vmatpush1.msra.mxu0 0.0
    %89 = vmatprep.subr.mxu0 0.0
    %90 = vmatpush1.msra.mxu0 0.0
    %91 = vmatprep.subr.mxu0 0.0
    %92 = vmatpush1.msra.mxu0 0.0
    %93 = vmatprep.subr.mxu0 0.0
    %94 = vmatpush1.msra.mxu0 0.0
    %95 = vmatprep.subr.mxu0 0.0
    %96 = vmatpush1.msra.mxu0 0.0
    %97 = vmatprep.subr.mxu0 0.0
    %98 = vmatpush1.msra.mxu0 0.0
    %99 = vmatprep.subr.mxu0 0.0
    %100 = vmatpush1.msra.mxu0 0.0
    %101 = vmatprep.subr.mxu0 0.0
    %102 = vmatpush1.msra.mxu0 0.0
    %103 = vmatprep.subr.mxu0 0.0
    %104 = vmatpush1.msra.mxu0 0.0
    %105 = vmatprep.subr.mxu0 0.0
    %106 = vmatpush1.msra.mxu0 0.0
    %107 = vmatprep.subr.mxu0 0.0
    %108 = vmatpush1.msra.mxu0 0.0
    %109 = vmatprep.mubr.f32.mxu0 0.0
    %110 = vmatmul.mubr.f32.gmra.mrb[0].mxu0 %v28
    %v111 = vpop.f32.mrb[0].mxu0
    %v112 = vadd.f32 0.0, %v111
    %v113 = vpop.f32.mrb[0].mxu0
    %114 = vdwg.mxu0
    %v115 = vadd.f32 %v27, %v112
    %116 = vst [vmem:[#allocation2] sm:$0xff] %v115
    // Predicated region
    $region18: #{linear_layer.1} parent=1 // pred_check
      %p117 = pneg %p15
    $region19: #{linear_layer.1} parent=1 // pred_check_branch
      %119 = sbr.rel (%p117) target = $region21
    $region20: #{linear_layer.1} parent=1 // pred_region
      %v120 = vld [vmem:[#allocation2] sm:$0xff]
      %121 = vst [vmem:[#allocation3] sm:$0xff] %v120
    $region21: #{linear_layer.1} parent=1 // pred_fallthru
      _
    // Predicated region
    $region22: #{linear_layer.1} parent=1 // pred_check
      _
    $region23: #{linear_layer.1} parent=1 // pred_check_branch
      %123 = sbr.rel (0) target = $region25
    $region24: #{linear_layer.1} parent=1 // pred_region
      %s125 = ssub.s32 128, 128
      %126 = vsyncadd [#allocation4], %s125
      %s128 = sshll.u32 [#allocation3], 4
      %s129 = int_to_ptr.vmem [resolvable:$true] %s128
      %131 = dma.vmem_to_hbm [thread:$0]  %s129, 128, %s3, [#allocation4]
    $region25: #{linear_layer.1} parent=1 // pred_fallthru
      _
    // Predicated region
    $region26: #{linear_layer.1} parent=1 // pred_check
      _
    $region27: #{linear_layer.1} parent=1 // pred_check_branch
      %133 = sbr.rel (0) target = $region29
    $region28: #{linear_layer.1} parent=1 // pred_region
      %134 = dma.done [#allocation4], 128
    $region29: #{linear_layer.1} parent=1 // pred_fallthru
      _
    %135 = vsyncpa [#allocation4], 1

</llo_original>
